<compile_context>
chip_gen: v5e
topology: v5e:2x2
jax: 0.10.0
libtpu: 0.0.40
codegen_flags: <defaults>
</compile_context>

<pallas_src>
import jax
import jax.numpy as jnp
from jax.experimental import pallas as pl
from jax.experimental.pallas import tpu as pltpu

D_MODEL = 512
MAX_LEN = 128


def _pos_enc_kernel(x_ref, pos_ref, o_ref):
    # x_ref: (bb, T, D), pos_ref: (T, D) -> broadcast-add over the batch dim,
    # computed in the (promoted) output dtype.
    x = x_ref[...].astype(o_ref.dtype)
    pos = pos_ref[...].astype(o_ref.dtype)
    o_ref[...] = x + pos[None, :, :]


def _vmem_capacity_bytes():
    """Generation-aware VMEM query (64 MiB v7x, 128 MiB v5e/v6e)."""
    try:
        return int(pltpu.get_tpu_info().vmem_capacity_bytes)
    except Exception:
        return 64 << 20  # most conservative (v7x)


def positional_encoding(x, pos_emb, *, block_b=None, donate_x=False):
    """x: (B, T, D).  pos_emb: (max_len, D) learned positional table.

    Returns x + pos_emb[:T] broadcast over the batch axis (the PyTorch
    PositionalEncoding.forward -- it has no dropout)."""
    B, T, D = x.shape
    max_len, d_model = pos_emb.shape
    assert D == d_model, f"d_model mismatch: {D} vs {d_model}"
    assert T <= max_len, f"sequence length {T} exceeds max_len {max_len}"

    out_dtype = jnp.promote_types(x.dtype, pos_emb.dtype)

    # Embedding lookup of arange(T) == first T rows of the table. When T is
    # sublane-aligned the BlockSpec below selects them directly from the full
    # table (no extra XLA slice copy in HBM); otherwise slice in the wrapper
    # so the block equals the full array (satisfies the (8,128) layout rule).
    if T == max_len or T % 8 == 0:
        pos_arg = pos_emb
    else:
        pos_arg = pos_emb[:T]

    row_bytes_in = T * D * x.dtype.itemsize
    row_bytes_out = T * D * jnp.dtype(out_dtype).itemsize

    if block_b is None:
        vmem_cap = _vmem_capacity_bytes()
        # ~2-4 MiB per x-block: enough to sit at ~85-90% of HBM roofline,
        # small enough that 2x(in) + 2x(out) double buffering stays well
        # under the default scoped-VMEM limit on v5e/v6e/v7x.
        budget = min(4 << 20, max(1 << 20, vmem_cap // 16))
        bb = max(1, min(B, budget // max(1, row_bytes_in)))
        # Megacore (v7x): keep >= 2 grid steps only when there is enough work
        # to keep both TensorCores' DMA engines busy; for small inputs a
        # single grid step avoids pure per-step/sync overhead.
        total_bytes = B * row_bytes_in
        if total_bytes >= (8 << 20) and B >= 2:
            bb = min(bb, pl.cdiv(B, 2))
        block_b = bb

    # cdiv grid: awkward / prime B just gets a masked partial last block
    # (safe for an elementwise add) instead of collapsing to block_b = 1.
    grid = (pl.cdiv(B, block_b),)

    # Explicit scoped-VMEM limit sized to the chosen blocks with headroom.
    resident = (2 * block_b * row_bytes_in          # double-buffered input
                + 2 * block_b * row_bytes_out       # double-buffered output
                + 2 * T * D * pos_emb.dtype.itemsize)   # resident pos block
    vmem_limit = int(min(48 << 20, max(32 << 20, (resident * 3) // 2)))

    extra_kwargs = {}
    if donate_x and out_dtype == x.dtype:
        # Avoids allocating a second B*T*D HBM buffer when x is donated.
        extra_kwargs["input_output_aliases"] = {0: 0}

    return pl.pallas_call(
        _pos_enc_kernel,
        out_shape=jax.ShapeDtypeStruct((B, T, D), out_dtype),
        grid_spec=pltpu.PrefetchScalarGridSpec(
            num_scalar_prefetch=0,
            grid=grid,
            in_specs=[
                # x: (block_b, T, D) tile per grid step; last two dims are the
                # full T and D=512 -> (8,128) layout rule satisfied.
                pl.BlockSpec((block_b, T, D), lambda i: (i, 0, 0)),
                # positional table: first-T-rows block, constant index_map ->
                # stays resident in VMEM across grid steps (no repeated DMA).
                pl.BlockSpec((T, D), lambda i: (0, 0)),
            ],
            out_specs=pl.BlockSpec((block_b, T, D), lambda i: (i, 0, 0)),
        ),
        compiler_params=pltpu.CompilerParams(
            dimension_semantics=("parallel",),
            vmem_limit_bytes=vmem_limit,
        ),
        **extra_kwargs,
    )(x, pos_arg)


def reference_positional_encoding(x, pos_emb):
    """Pure-JAX reference mirroring the PyTorch module."""
    B, T, D = x.shape
    return x + pos_emb[:T][None, :, :]


if __name__ == "__main__":
    key = jax.random.PRNGKey(0)
    kx, kp, kx2 = jax.random.split(key, 3)
    # Deterministic synthetic learned embedding table (nn.Embedding weight).
    pos_emb = jax.random.normal(kp, (MAX_LEN, D_MODEL), jnp.float32) * 0.02

    # Small primary test (B=2, T=8, D=512) -> single grid step.
    B, T = 2, 8
    x = jax.random.normal(kx, (B, T, D_MODEL), jnp.float32)
    out = jax.block_until_ready(positional_encoding(x, pos_emb))
    ref = reference_positional_encoding(x, pos_emb)
    assert out.shape == (B, T, D_MODEL)
    assert jnp.allclose(out, ref, rtol=1e-6, atol=1e-6), \
        f"max abs err {jnp.max(jnp.abs(out - ref))}"

    # Awkward batch size (B=3, forced block_b=2) -> cdiv grid with a masked
    # partial last block; validates the removal of the divisor-of-B search.
    B2 = 3
    x2 = jax.random.normal(kx2, (B2, T, D_MODEL), jnp.float32)
    out2 = jax.block_until_ready(positional_encoding(x2, pos_emb, block_b=2))
    ref2 = reference_positional_encoding(x2, pos_emb)
    assert out2.shape == (B2, T, D_MODEL)
    assert jnp.allclose(out2, ref2, rtol=1e-6, atol=1e-6), \
        f"max abs err {jnp.max(jnp.abs(out2 - ref2))}"

    print("KERNEL_OK")
</pallas_src>

<mosaic_0001>
module attributes {stable_mosaic.version = 11 : i64} {
  func.func @_pos_enc_kernel(%arg0: i32, %arg1: memref<2x8x512xf32, #tpu.memory_space<vmem>>, %arg2: memref<8x512xf32, #tpu.memory_space<vmem>>, %arg3: memref<2x8x512xf32, #tpu.memory_space<vmem>>) attributes {dimension_semantics = [#tpu.dimension_semantics<parallel>], iteration_bounds = array<i64: 1>, scalar_prefetch = 0 : i64, scratch_operands = 0 : i64, tpu.core_type = #tpu.core_type<tc>, window_params = [{transform_indices = @transform_0, window_bounds = array<i64: 2, 8, 512>}, {transform_indices = @transform_1, window_bounds = array<i64: 8, 512>}, {transform_indices = @transform_2, window_bounds = array<i64: 2, 8, 512>}]} {
    %c0 = arith.constant 0 : index
    %c0_0 = arith.constant 0 : index
    %c0_1 = arith.constant 0 : index
    %0 = vector.load %arg1[%c0, %c0_0, %c0_1] : memref<2x8x512xf32, #tpu.memory_space<vmem>>, vector<2x8x512xf32>
    %c0_2 = arith.constant 0 : index
    %c0_3 = arith.constant 0 : index
    %1 = vector.load %arg2[%c0_2, %c0_3] : memref<8x512xf32, #tpu.memory_space<vmem>>, vector<8x512xf32>
    %2 = vector.shape_cast %1 : vector<8x512xf32> to vector<1x8x512xf32>
    %3 = vector.broadcast %2 : vector<1x8x512xf32> to vector<2x8x512xf32>
    %4 = arith.addf %0, %3 : vector<2x8x512xf32>
    %c0_4 = arith.constant 0 : index
    %c0_5 = arith.constant 0 : index
    %c0_6 = arith.constant 0 : index
    %5 = vector.load %arg3[%c0_4, %c0_5, %c0_6] : memref<2x8x512xf32, #tpu.memory_space<vmem>>, vector<2x8x512xf32>
    tpu.vector_store %arg3[%c0_4, %c0_5, %c0_6], %4 {strides = array<i32>} : memref<2x8x512xf32, #tpu.memory_space<vmem>>, vector<2x8x512xf32>,
    return
  }
  func.func @transform_0(%arg0: i32) -> (i32, i32, i32) {
    %c0_i32 = arith.constant 0 : i32
    %c0_i32_0 = arith.constant 0 : i32
    %c0_i32_1 = arith.constant 0 : i32
    return %arg0, %c0_i32, %c0_i32_0 : i32, i32, i32
  }
  func.func @transform_1(%arg0: i32) -> (i32, i32) {
    %c0_i32 = arith.constant 0 : i32
    %c0_i32_0 = arith.constant 0 : i32
    %c0_i32_1 = arith.constant 0 : i32
    return %c0_i32, %c0_i32_0 : i32, i32
  }
  func.func @transform_2(%arg0: i32) -> (i32, i32, i32) {
    %c0_i32 = arith.constant 0 : i32
    %c0_i32_0 = arith.constant 0 : i32
    %c0_i32_1 = arith.constant 0 : i32
    return %arg0, %c0_i32, %c0_i32_0 : i32, i32, i32
  }
}

</mosaic_0001>

<llo_original>
// kernel: tpu_custom_call.1
$region0: #{tpu_custom_call.1}
  #allocation0 [shape = 'u32[]', space=smem, size = 0x4, offset = 0x4, fixed_abs, tag = 'smem constant byte address 0x4 - core index']
  #allocation1 [shape = 'u32[72,128]{1,0:T(1,128)}', space=vmem, size = 0x9000, scoped, tag = 'internal scratch']
  %s0 = inlined_call_operand.hbm [shape: f32[2,8,512], index: 0, kind: input, shape index: {}]
  %s1 = inlined_call_operand.hbm [shape: f32[128,512], index: 1, kind: input, shape index: {}]
  %s2 = inlined_call_operand.hbm [shape: f32[2,8,512], index: 2, kind: output, shape index: {}]
  %s3 = sld [smem:[#allocation0]]
  $region26: #{tpu_custom_call.1} parent=0
    _
  %s5 = ssub.s32 1, %s3
  %s6 = scalar_select 0, %s5, %s3
  $region1: #{tpu_custom_call.1} parent=0
    #allocation2 [shape = 'u8[32768]{0}', space=vmem, size = 0x8000, scoped, tag = 'input window, operand 0, single buffered']
    #allocation3 [shape = 's32[1]{0}', space=sflag, size = 0x4, scoped, tag = 'scoped memory for tpu_custom_call.1']
    #allocation4 [shape = 's32[1]{0}', space=sflag, size = 0x4, scoped, tag = 'scoped memory for tpu_custom_call.1']
    #allocation5 [shape = 'u8[16384]{0}', space=vmem, size = 0x4000, scoped, tag = 'input window, operand 1, single buffered']
    #allocation6 [shape = 's32[1]{0}', space=sflag, size = 0x4, scoped, tag = 'scoped memory for tpu_custom_call.1']
    #allocation7 [shape = 'u8[32768]{0}', space=vmem, size = 0x8000, scoped, tag = 'output window, operand 0, single buffered']
    %7 = vsyncpa [#allocation3], 0
    %8 = vsyncpa [#allocation6], 0
    %9 = vsyncpa [#allocation4], 0
    // Predicated region
    $region2: #{tpu_custom_call.1} parent=1 // pred_check
      _
    $region3: #{tpu_custom_call.1} parent=1 // pred_check_branch
      %11 = sbr.rel (0) target = $region5
    $region4: #{tpu_custom_call.1} parent=1 // pred_region
      %13 = vsyncadd [#allocation3], 0
      %s14 = sshll.u32 %s0, 4
      %s15 = int_to_ptr.hbm [resolvable:$true] %s14
      %s16 = sshll.u32 [#allocation2], 4
      %s17 = int_to_ptr.vmem [resolvable:$true] %s16
      %22 = dma.hbm_to_vmem [thread:$0]  %s15, 1024, %s17, [#allocation3], 512, 512, 32
    $region5: #{tpu_custom_call.1} parent=1 // pred_fallthru
      _
    // Predicated region
    $region6: #{tpu_custom_call.1} parent=1 // pred_check
      _
    $region7: #{tpu_custom_call.1} parent=1 // pred_check_branch
      %24 = sbr.rel (0) target = $region9
    $region8: #{tpu_custom_call.1} parent=1 // pred_region
      %26 = vsyncadd [#allocation6], 0
      %s28 = sshll.u32 %s1, 4
      %s29 = int_to_ptr.hbm [resolvable:$true] %s28
      %s30 = sshll.u32 [#allocation5], 4
      %s31 = int_to_ptr.vmem [resolvable:$true] %s30
      %33 = dma.hbm_to_vmem [thread:$0]  %s29, 512, %s31, [#allocation6]
    $region9: #{tpu_custom_call.1} parent=1 // pred_fallthru
      _
    // Predicated region
    $region10: #{tpu_custom_call.1} parent=1 // pred_check
      _
    $region11: #{tpu_custom_call.1} parent=1 // pred_check_branch
      %35 = sbr.rel (0) target = $region13
    $region12: #{tpu_custom_call.1} parent=1 // pred_region
      %37 = dma.done [#allocation3], 1024
    $region13: #{tpu_custom_call.1} parent=1 // pred_fallthru
      _
    // Predicated region
    $region14: #{tpu_custom_call.1} parent=1 // pred_check
      _
    $region15: #{tpu_custom_call.1} parent=1 // pred_check_branch
      %39 = sbr.rel (0) target = $region17
    $region16: #{tpu_custom_call.1} parent=1 // pred_region
      %41 = dma.done [#allocation6], 512
    $region17: #{tpu_custom_call.1} parent=1 // pred_fallthru
      _
    %v42 = vld [vmem:[#allocation2] sm:$0xff]
    %v43 = vld [vmem:[#allocation2 + $0x8] sm:$0xff]
    %v44 = vld [vmem:[#allocation2 + $0x10] sm:$0xff]
    %v45 = vld [vmem:[#allocation2 + $0x18] sm:$0xff]
    %v46 = vld [vmem:[#allocation2 + $0x20] sm:$0xff]
    %v47 = vld [vmem:[#allocation2 + $0x28] sm:$0xff]
    %v48 = vld [vmem:[#allocation2 + $0x30] sm:$0xff]
    %v49 = vld [vmem:[#allocation2 + $0x38] sm:$0xff]
    %v50 = vld [vmem:[#allocation5] sm:$0xff]
    %v51 = vld [vmem:[#allocation5 + $0x8] sm:$0xff]
    %v52 = vld [vmem:[#allocation5 + $0x10] sm:$0xff]
    %v53 = vld [vmem:[#allocation5 + $0x18] sm:$0xff]
    %v54 = vadd.f32 %v42, %v50
    %v55 = vadd.f32 %v43, %v51
    %v56 = vadd.f32 %v44, %v52
    %v57 = vadd.f32 %v45, %v53
    %v58 = vadd.f32 %v46, %v50
    %v59 = vadd.f32 %v47, %v51
    %v60 = vadd.f32 %v48, %v52
    %v61 = vadd.f32 %v49, %v53
    %62 = vst [vmem:[#allocation7] sm:$0xff] %v54
    %63 = vst [vmem:[#allocation7 + $0x8] sm:$0xff] %v55
    %64 = vst [vmem:[#allocation7 + $0x10] sm:$0xff] %v56
    %65 = vst [vmem:[#allocation7 + $0x18] sm:$0xff] %v57
    %66 = vst [vmem:[#allocation7 + $0x20] sm:$0xff] %v58
    %67 = vst [vmem:[#allocation7 + $0x28] sm:$0xff] %v59
    %68 = vst [vmem:[#allocation7 + $0x30] sm:$0xff] %v60
    %69 = vst [vmem:[#allocation7 + $0x38] sm:$0xff] %v61
    // Predicated region
    $region18: #{tpu_custom_call.1} parent=1 // pred_check
      _
    $region19: #{tpu_custom_call.1} parent=1 // pred_check_branch
      %71 = sbr.rel (0) target = $region21
    $region20: #{tpu_custom_call.1} parent=1 // pred_region
      %73 = vsyncadd [#allocation4], 0
      %s74 = sshll.u32 [#allocation7], 4
      %s75 = int_to_ptr.vmem [resolvable:$true] %s74
      %s76 = sshll.u32 %s2, 4
      %s77 = int_to_ptr.hbm [resolvable:$true] %s76
      %82 = dma.vmem_to_hbm [thread:$0]  %s75, 1024, %s77, [#allocation4], 512, 512, 32
    $region21: #{tpu_custom_call.1} parent=1 // pred_fallthru
      _
    // Predicated region
    $region22: #{tpu_custom_call.1} parent=1 // pred_check
      _
    $region23: #{tpu_custom_call.1} parent=1 // pred_check_branch
      %84 = sbr.rel (0) target = $region25
    $region24: #{tpu_custom_call.1} parent=1 // pred_region
      %86 = dma.done [#allocation4], 1024
    $region25: #{tpu_custom_call.1} parent=1 // pred_fallthru
      _
    %87 = vsyncpa [#allocation3], 1
    %88 = vsyncpa [#allocation6], 1
    %89 = vsyncpa [#allocation4], 1

</llo_original>
